<compile_context>
chip_gen: v6e
topology: v6e:2x2x1
jax: 0.10.0
libtpu: 0.0.40
codegen_flags: <defaults>
</compile_context>

<pallas_src>
import jax
import jax.numpy as jnp
from jax.experimental import pallas as pl
from jax.experimental.pallas import tpu as pltpu

HIDDEN = 32              # hidden_size
OUT = 16                 # output_size
BATCH = 4
G4 = 4 * HIDDEN          # 128 = one full lane width
N_W = OUT + HIDDEN       # 48 weight rows in the packed gate slab


# --------------------------- shared cell math --------------------------------
def _lstm_step(x, h, c, wbcat_ref, wbout_ref):
    """One LSTM cell step + output projection on values already in vregs.

    wbcat_ref : [N_W+3, 4H]  rows 0..15  = W_ih^T (i/f/o cols pre-scaled by 0.5)
                             rows 16..47 = W_hh^T (i/f/o cols pre-scaled by 0.5)
                             row  48     = (b_ih+b_hh) (i/f/o pre-scaled by 0.5)
                             row  49     = activation scale  (1 on g, 0.5 else)
                             row  50     = activation offset (0 on g, 0.5 else)
    wbout_ref : [HIDDEN+1, OUT]  rows 0..31 = W_out^T, row 32 = b_out
    """
    w_x = wbcat_ref[0:OUT, :]            # [OUT, 4H]
    w_h = wbcat_ref[OUT:N_W, :]          # [HIDDEN, 4H]
    aux = wbcat_ref[N_W:N_W + 3, :]      # [3, 4H]: bias, act_scale, act_bias

    gates = (jnp.dot(x, w_x, preferred_element_type=jnp.float32)
             + jnp.dot(h, w_h, preferred_element_type=jnp.float32)
             + aux[0:1, :])

    # Single whole-vreg tanh; sigmoid lanes recovered as 0.5*tanh(x/2)+0.5
    # (the /2 is already folded into the packed weights/bias).
    act = jnp.tanh(gates) * aux[1:2, :] + aux[2:3, :]

    i_g = act[:, 0 * HIDDEN:1 * HIDDEN]
    f_g = act[:, 1 * HIDDEN:2 * HIDDEN]
    g_g = act[:, 2 * HIDDEN:3 * HIDDEN]
    o_g = act[:, 3 * HIDDEN:4 * HIDDEN]

    c_new = f_g * c + i_g * g_g
    h_new = o_g * jnp.tanh(c_new)

    emb = (jnp.dot(h_new, wbout_ref[0:HIDDEN, :],
                   preferred_element_type=jnp.float32)
           + wbout_ref[HIDDEN:HIDDEN + 1, :])
    return emb, h_new, c_new


# --------------------------- single-step kernel ------------------------------
def decoder_step_kernel(x_ref, state_ref, wbcat_ref, wbout_ref,
                        emb_ref, state_out_ref):
    emb, h_new, c_new = _lstm_step(x_ref[...], state_ref[0], state_ref[1],
                                   wbcat_ref, wbout_ref)
    emb_ref[...] = emb
    state_out_ref[0] = h_new
    state_out_ref[1] = c_new


def decoder_forward(params, inp_token, hid, batch_size, sequence_length=None):
    """Pallas equivalent of Decoder.forward (one LSTM step + projection)."""
    del sequence_length  # unused in the PyTorch forward as well
    x = inp_token.reshape(batch_size, OUT)
    state = jnp.concatenate([hid[0].reshape(1, batch_size, HIDDEN),
                             hid[1].reshape(1, batch_size, HIDDEN)], axis=0)

    vmem = pl.BlockSpec(memory_space=pltpu.MemorySpace.VMEM)
    emb, state_new = pl.pallas_call(
        decoder_step_kernel,
        out_shape=(
            jax.ShapeDtypeStruct((batch_size, OUT), jnp.float32),
            jax.ShapeDtypeStruct((2, batch_size, HIDDEN), jnp.float32),
        ),
        in_specs=[vmem] * 4,
        out_specs=(vmem, vmem),
        input_output_aliases={1: 1},   # reuse the (h, c) HBM buffer in place
    )(x, state, params["wb_cat"], params["wb_out"])

    return emb, (state_new[0:1], state_new[1:2])


# ----------------------- fused multi-step decode kernel ----------------------
def decoder_decode_kernel(x0_ref, state0_ref, wbcat_ref, wbout_ref,
                          out_ref, state_out_ref, x_s, h_s, c_s):
    t = pl.program_id(0)

    @pl.when(t == 0)
    def _():
        x_s[...] = x0_ref[...]
        h_s[...] = state0_ref[0]
        c_s[...] = state0_ref[1]

    emb, h_new, c_new = _lstm_step(x_s[...], h_s[...], c_s[...],
                                   wbcat_ref, wbout_ref)

    out_ref[0] = emb
    # Feed the projected output straight back as the next input token.
    x_s[...] = emb
    h_s[...] = h_new
    c_s[...] = c_new
    state_out_ref[0] = h_new
    state_out_ref[1] = c_new


def decoder_decode(params, inp_token, hid, batch_size, num_steps):
    """T autoregressive decode steps in ONE pallas_call (weights loaded once)."""
    x = inp_token.reshape(batch_size, OUT)
    state = jnp.concatenate([hid[0].reshape(1, batch_size, HIDDEN),
                             hid[1].reshape(1, batch_size, HIDDEN)], axis=0)

    out_seq, state_new = pl.pallas_call(
        decoder_decode_kernel,
        out_shape=(
            jax.ShapeDtypeStruct((num_steps, batch_size, OUT), jnp.float32),
            jax.ShapeDtypeStruct((2, batch_size, HIDDEN), jnp.float32),
        ),
        grid=(num_steps,),
        in_specs=[
            pl.BlockSpec((batch_size, OUT), lambda t: (0, 0)),
            pl.BlockSpec((2, batch_size, HIDDEN), lambda t: (0, 0, 0)),
            pl.BlockSpec((N_W + 3, G4), lambda t: (0, 0)),
            pl.BlockSpec((HIDDEN + 1, OUT), lambda t: (0, 0)),
        ],
        out_specs=(
            pl.BlockSpec((1, batch_size, OUT), lambda t: (t, 0, 0)),
            pl.BlockSpec((2, batch_size, HIDDEN), lambda t: (0, 0, 0)),
        ),
        scratch_shapes=[
            pltpu.VMEM((batch_size, OUT), jnp.float32),     # next input token
            pltpu.VMEM((batch_size, HIDDEN), jnp.float32),  # h
            pltpu.VMEM((batch_size, HIDDEN), jnp.float32),  # c
        ],
        compiler_params=pltpu.CompilerParams(
            dimension_semantics=("arbitrary",)),
    )(x, state, params["wb_cat"], params["wb_out"])

    return out_seq, (state_new[0:1], state_new[1:2])


# ------------------------------- params / refs --------------------------------
def init_hidden(batch_size):
    """Decoder.init_hidden: zero (h, c), each [1, batch, HIDDEN]."""
    return (jnp.zeros((1, batch_size, HIDDEN), jnp.float32),
            jnp.zeros((1, batch_size, HIDDEN), jnp.float32))


def init_raw_params(key):
    ks = jax.random.split(key, 6)
    scale = 0.1
    # Stored pre-transposed ([in, 4H] / [in, OUT]) so x @ W works directly.
    return {
        "w_ih": scale * jax.random.normal(ks[0], (OUT, G4), jnp.float32),
        "w_hh": scale * jax.random.normal(ks[1], (HIDDEN, G4), jnp.float32),
        "b_ih": scale * jax.random.normal(ks[2], (G4,), jnp.float32),
        "b_hh": scale * jax.random.normal(ks[3], (G4,), jnp.float32),
        "w_out": scale * jax.random.normal(ks[4], (HIDDEN, OUT), jnp.float32),
        "b_out": scale * jax.random.normal(ks[5], (OUT,), jnp.float32),
    }


def pack_params(raw):
    """Pack weights + bias + activation constants into two VMEM slabs."""
    col = jnp.arange(G4)
    is_g = (col >= 2 * HIDDEN) & (col < 3 * HIDDEN)        # gate order: i,f,g,o
    pre = jnp.where(is_g, 1.0, 0.5).astype(jnp.float32)    # x/2 for sigmoid lanes
    act_scale = jnp.where(is_g, 1.0, 0.5).astype(jnp.float32)
    act_bias = jnp.where(is_g, 0.0, 0.5).astype(jnp.float32)

    w_cat = jnp.concatenate([raw["w_ih"], raw["w_hh"]], axis=0) * pre[None, :]
    b_cat = (raw["b_ih"] + raw["b_hh"]) * pre
    wb_cat = jnp.concatenate(
        [w_cat, b_cat[None, :], act_scale[None, :], act_bias[None, :]], axis=0)
    wb_out = jnp.concatenate([raw["w_out"], raw["b_out"][None, :]], axis=0)
    return {"wb_cat": wb_cat, "wb_out": wb_out}   # [51,128], [33,16]


def reference_step(raw, x, h, c):
    """Pure-JAX reference matching PyTorch LSTM + Linear semantics."""
    gates = x @ raw["w_ih"] + h @ raw["w_hh"] + raw["b_ih"] + raw["b_hh"]
    i_g = jax.nn.sigmoid(gates[:, 0 * HIDDEN:1 * HIDDEN])
    f_g = jax.nn.sigmoid(gates[:, 1 * HIDDEN:2 * HIDDEN])
    g_g = jnp.tanh(gates[:, 2 * HIDDEN:3 * HIDDEN])
    o_g = jax.nn.sigmoid(gates[:, 3 * HIDDEN:4 * HIDDEN])
    c_new = f_g * c + i_g * g_g
    h_new = o_g * jnp.tanh(c_new)
    emb = h_new @ raw["w_out"] + raw["b_out"]
    return emb, h_new, c_new


if __name__ == "__main__":
    key = jax.random.PRNGKey(0)
    k_par, k_tok = jax.random.split(key)

    raw = init_raw_params(k_par)
    params = pack_params(raw)

    tok_ids = jax.random.randint(k_tok, (BATCH,), 0, OUT)
    inp_token = jax.nn.one_hot(tok_ids, OUT, dtype=jnp.float32)   # [B, OUT]
    hid = init_hidden(BATCH)

    # --- single-step entry point (== Decoder.forward) ---
    out_emb, hid1 = decoder_forward(params, inp_token, hid, BATCH,
                                    sequence_length=1)
    out_emb = jax.block_until_ready(out_emb)

    ref_emb, ref_h, ref_c = reference_step(raw, inp_token, hid[0][0], hid[1][0])
    assert out_emb.shape == (BATCH, OUT)
    assert jnp.allclose(out_emb, ref_emb, atol=1e-4, rtol=1e-4)
    assert jnp.allclose(hid1[0][0], ref_h, atol=1e-4, rtol=1e-4)
    assert jnp.allclose(hid1[1][0], ref_c, atol=1e-4, rtol=1e-4)

    # --- fused T-step autoregressive decode in a single pallas_call ---
    T = 8
    out_seq, hidT = decoder_decode(params, inp_token, hid, BATCH, num_steps=T)
    out_seq = jax.block_until_ready(out_seq)

    x, h, c = inp_token, hid[0][0], hid[1][0]
    ref_seq = []
    for _ in range(T):
        x, h, c = reference_step(raw, x, h, c)
        ref_seq.append(x)
    ref_seq = jnp.stack(ref_seq, axis=0)

    assert out_seq.shape == (T, BATCH, OUT)
    assert hidT[0].shape == (1, BATCH, HIDDEN) and hidT[1].shape == (1, BATCH, HIDDEN)
    assert jnp.allclose(out_seq, ref_seq, atol=1e-4, rtol=1e-4)
    assert jnp.allclose(hidT[0][0], h, atol=1e-4, rtol=1e-4)
    assert jnp.allclose(hidT[1][0], c, atol=1e-4, rtol=1e-4)
    assert bool(jnp.all(jnp.isfinite(out_seq)))

    print("KERNEL_OK")
</pallas_src>

<mosaic_0001>
module attributes {stable_mosaic.version = 11 : i64} {
  func.func @decoder_step_kernel(%arg0: memref<4x16xf32, #tpu.memory_space<vmem>>, %arg1: memref<2x4x32xf32, #tpu.memory_space<vmem>>, %arg2: memref<51x128xf32, #tpu.memory_space<vmem>>, %arg3: memref<33x16xf32, #tpu.memory_space<vmem>>, %arg4: memref<4x16xf32, #tpu.memory_space<vmem>>, %arg5: memref<2x4x32xf32, #tpu.memory_space<vmem>>) attributes {dimension_semantics = [], scalar_prefetch = 0 : i64, scratch_operands = 0 : i64, tpu.core_type = #tpu.core_type<tc>} {
    %c0 = arith.constant 0 : index
    %c0_0 = arith.constant 0 : index
    %0 = vector.load %arg0[%c0, %c0_0] : memref<4x16xf32, #tpu.memory_space<vmem>>, vector<4x16xf32>
    %c0_1 = arith.constant 0 : index
    %c0_2 = arith.constant 0 : index
    %c0_3 = arith.constant 0 : index
    %1 = vector.load %arg1[%c0_1, %c0_2, %c0_3] : memref<2x4x32xf32, #tpu.memory_space<vmem>>, vector<1x4x32xf32>
    %2 = vector.shape_cast %1 : vector<1x4x32xf32> to vector<4x32xf32>
    %c1 = arith.constant 1 : index
    %c0_4 = arith.constant 0 : index
    %c0_5 = arith.constant 0 : index
    %3 = vector.load %arg1[%c1, %c0_4, %c0_5] : memref<2x4x32xf32, #tpu.memory_space<vmem>>, vector<1x4x32xf32>
    %4 = vector.shape_cast %3 : vector<1x4x32xf32> to vector<4x32xf32>
    %c0_6 = arith.constant 0 : index
    %c0_7 = arith.constant 0 : index
    %5 = vector.load %arg2[%c0_6, %c0_7] : memref<51x128xf32, #tpu.memory_space<vmem>>, vector<16x128xf32>
    %c16 = arith.constant 16 : index
    %c0_8 = arith.constant 0 : index
    %6 = vector.load %arg2[%c16, %c0_8] : memref<51x128xf32, #tpu.memory_space<vmem>>, vector<32x128xf32>
    %c48 = arith.constant 48 : index
    %c0_9 = arith.constant 0 : index
    %7 = vector.load %arg2[%c48, %c0_9] : memref<51x128xf32, #tpu.memory_space<vmem>>, vector<3x128xf32>
    %cst = arith.constant dense<0.000000e+00> : vector<4x128xf32>
    %8 = tpu.matmul %0, %5, %cst {dimension_numbers = #tpu.dot_dimension_numbers<[1], [0], [0], [1], [0, 0, 1, 1], [], []>} : vector<4x16xf32>, vector<16x128xf32>, vector<4x128xf32> -> vector<4x128xf32>
    %cst_10 = arith.constant dense<0.000000e+00> : vector<4x128xf32>
    %9 = tpu.matmul %2, %6, %cst_10 {dimension_numbers = #tpu.dot_dimension_numbers<[1], [0], [0], [1], [0, 0, 1, 1], [], []>} : vector<4x32xf32>, vector<32x128xf32>, vector<4x128xf32> -> vector<4x128xf32>
    %10 = arith.addf %8, %9 : vector<4x128xf32>
    %11 = vector.extract_strided_slice %7 {offsets = [0, 0], sizes = [1, 128], strides = [1, 1]} : vector<3x128xf32> to vector<1x128xf32>
    %12 = vector.broadcast %11 : vector<1x128xf32> to vector<4x128xf32>
    %13 = arith.addf %10, %12 : vector<4x128xf32>
    %14 = math.tanh %13 : vector<4x128xf32>
    %15 = vector.extract_strided_slice %7 {offsets = [1, 0], sizes = [1, 128], strides = [1, 1]} : vector<3x128xf32> to vector<1x128xf32>
    %16 = vector.broadcast %15 : vector<1x128xf32> to vector<4x128xf32>
    %17 = arith.mulf %14, %16 : vector<4x128xf32>
    %18 = vector.extract_strided_slice %7 {offsets = [2, 0], sizes = [1, 128], strides = [1, 1]} : vector<3x128xf32> to vector<1x128xf32>
    %19 = vector.broadcast %18 : vector<1x128xf32> to vector<4x128xf32>
    %20 = arith.addf %17, %19 : vector<4x128xf32>
    %21 = vector.extract_strided_slice %20 {offsets = [0, 0], sizes = [4, 32], strides = [1, 1]} : vector<4x128xf32> to vector<4x32xf32>
    %22 = vector.extract_strided_slice %20 {offsets = [0, 32], sizes = [4, 32], strides = [1, 1]} : vector<4x128xf32> to vector<4x32xf32>
    %23 = vector.extract_strided_slice %20 {offsets = [0, 64], sizes = [4, 32], strides = [1, 1]} : vector<4x128xf32> to vector<4x32xf32>
    %24 = vector.extract_strided_slice %20 {offsets = [0, 96], sizes = [4, 32], strides = [1, 1]} : vector<4x128xf32> to vector<4x32xf32>
    %25 = arith.mulf %22, %4 : vector<4x32xf32>
    %26 = arith.mulf %21, %23 : vector<4x32xf32>
    %27 = arith.addf %25, %26 : vector<4x32xf32>
    %28 = math.tanh %27 : vector<4x32xf32>
    %29 = arith.mulf %24, %28 : vector<4x32xf32>
    %c0_11 = arith.constant 0 : index
    %c0_12 = arith.constant 0 : index
    %30 = vector.load %arg3[%c0_11, %c0_12] : memref<33x16xf32, #tpu.memory_space<vmem>>, vector<32x16xf32>
    %cst_13 = arith.constant dense<0.000000e+00> : vector<4x16xf32>
    %31 = tpu.matmul %29, %30, %cst_13 {dimension_numbers = #tpu.dot_dimension_numbers<[1], [0], [0], [1], [0, 0, 1, 1], [], []>} : vector<4x32xf32>, vector<32x16xf32>, vector<4x16xf32> -> vector<4x16xf32>
    %c32 = arith.constant 32 : index
    %c0_14 = arith.constant 0 : index
    %32 = vector.load %arg3[%c32, %c0_14] : memref<33x16xf32, #tpu.memory_space<vmem>>, vector<1x16xf32>
    %33 = vector.broadcast %32 : vector<1x16xf32> to vector<4x16xf32>
    %34 = arith.addf %31, %33 : vector<4x16xf32>
    %c0_15 = arith.constant 0 : index
    %c0_16 = arith.constant 0 : index
    %35 = vector.load %arg4[%c0_15, %c0_16] : memref<4x16xf32, #tpu.memory_space<vmem>>, vector<4x16xf32>
    tpu.vector_store %arg4[%c0_15, %c0_16], %34 {strides = array<i32>} : memref<4x16xf32, #tpu.memory_space<vmem>>, vector<4x16xf32>,
    %c0_17 = arith.constant 0 : index
    %c0_18 = arith.constant 0 : index
    %c0_19 = arith.constant 0 : index
    %36 = vector.load %arg5[%c0_17, %c0_18, %c0_19] : memref<2x4x32xf32, #tpu.memory_space<vmem>>, vector<1x4x32xf32>
    %37 = vector.shape_cast %36 : vector<1x4x32xf32> to vector<4x32xf32>
    %38 = vector.shape_cast %29 : vector<4x32xf32> to vector<1x4x32xf32>
    tpu.vector_store %arg5[%c0_17, %c0_18, %c0_19], %38 {strides = array<i32>} : memref<2x4x32xf32, #tpu.memory_space<vmem>>, vector<1x4x32xf32>,
    %c1_20 = arith.constant 1 : index
    %c0_21 = arith.constant 0 : index
    %c0_22 = arith.constant 0 : index
    %39 = vector.load %arg5[%c1_20, %c0_21, %c0_22] : memref<2x4x32xf32, #tpu.memory_space<vmem>>, vector<1x4x32xf32>
    %40 = vector.shape_cast %39 : vector<1x4x32xf32> to vector<4x32xf32>
    %41 = vector.shape_cast %27 : vector<4x32xf32> to vector<1x4x32xf32>
    tpu.vector_store %arg5[%c1_20, %c0_21, %c0_22], %41 {strides = array<i32>} : memref<2x4x32xf32, #tpu.memory_space<vmem>>, vector<1x4x32xf32>,
    return
  }
}

</mosaic_0001>

<llo_original>
// kernel: tpu_custom_call.1
$region0: #{tpu_custom_call.1}
  #allocation0 [shape = 'u32[]', space=smem, size = 0x4, offset = 0x4, fixed_abs, tag = 'smem constant byte address 0x4 - core index']
  #allocation1 [shape = 'u32[144,128]{1,0:T(1,128)}', space=vmem, size = 0x12000, scoped, tag = 'internal scratch']
  %s0 = inlined_call_operand.vmem [shape: f32[4,16], index: 0, kind: input, shape index: {}]
  %s1 = inlined_call_operand.hbm [shape: f32[2,4,32], index: 1, kind: input, shape index: {}, may-alias: {1,5}]
  %s2 = inlined_call_operand.vmem [shape: f32[51,128], index: 2, kind: input, shape index: {}]
  %s3 = inlined_call_operand.vmem [shape: f32[33,16], index: 3, kind: input, shape index: {}]
  %s4 = inlined_call_operand.hbm [shape: f32[4,16], index: 4, kind: output, shape index: {0}]
  %s5 = inlined_call_operand.hbm [shape: f32[2,4,32], index: 5, kind: output, shape index: {1}, may-alias: {1,5}]
  %6 = xla_tuple %s4, %s5
  %s7 = sld [smem:[#allocation0]]
  $region38: #{tpu_custom_call.1} parent=0
    _
  %s9 = ssub.s32 1, %s7
  %s10 = scalar_select 0, %s9, %s7
  $region1: #{tpu_custom_call.1} parent=0
    #allocation2 [shape = 'u8[4096]{0}', space=vmem, size = 0x1000, scoped, tag = 'input window, operand 1, single buffered']
    #allocation3 [shape = 's32[1]{0}', space=sflag, size = 0x4, scoped, tag = 'scoped memory for tpu_custom_call.1']
    #allocation4 [shape = 's32[1]{0}', space=sflag, size = 0x4, scoped, tag = 'scoped memory for tpu_custom_call.1']
    #allocation5 [shape = 'u8[2048]{0}', space=vmem, size = 0x800, scoped, tag = 'output window, operand 0, single buffered']
    #allocation6 [shape = 'u8[4096]{0}', space=vmem, size = 0x1000, scoped, tag = 'output window, operand 1, single buffered']
    #allocation7 [shape = 's32[1]{0}', space=sflag, size = 0x4, scoped, tag = 'scoped memory for tpu_custom_call.1']
    %11 = vsyncpa [#allocation3], 0
    %12 = vsyncpa [#allocation4], 0
    %13 = vsyncpa [#allocation7], 0
    // Predicated region
    $region2: #{tpu_custom_call.1} parent=1 // pred_check
      _
    $region3: #{tpu_custom_call.1} parent=1 // pred_check_branch
      %15 = sbr.rel (0) target = $region5
    $region4: #{tpu_custom_call.1} parent=1 // pred_region
      _
    $region5: #{tpu_custom_call.1} parent=1 // pred_fallthru
      _
    // Predicated region
    $region6: #{tpu_custom_call.1} parent=1 // pred_check
      _
    $region7: #{tpu_custom_call.1} parent=1 // pred_check_branch
      %17 = sbr.rel (0) target = $region9
    $region8: #{tpu_custom_call.1} parent=1 // pred_region
      %s19 = ssub.s32 128, 128
      %20 = vsyncadd [#allocation3], %s19
      %s21 = sshll.u32 [#allocation2], 4
      %s22 = int_to_ptr.vmem [resolvable:$true] %s21
      %27 = dma.hbm_to_vmem [thread:$0]  %s1, 128, %s22, [#allocation3], 64, 64, 4
    $region9: #{tpu_custom_call.1} parent=1 // pred_fallthru
      _
    // Predicated region
    $region10: #{tpu_custom_call.1} parent=1 // pred_check
      _
    $region11: #{tpu_custom_call.1} parent=1 // pred_check_branch
      %29 = sbr.rel (0) target = $region13
    $region12: #{tpu_custom_call.1} parent=1 // pred_region
      _
    $region13: #{tpu_custom_call.1} parent=1 // pred_fallthru
      _
    // Predicated region
    $region14: #{tpu_custom_call.1} parent=1 // pred_check
      _
    $region15: #{tpu_custom_call.1} parent=1 // pred_check_branch
      %31 = sbr.rel (0) target = $region17
    $region16: #{tpu_custom_call.1} parent=1 // pred_region
      _
    $region17: #{tpu_custom_call.1} parent=1 // pred_fallthru
      _
    // Predicated region
    $region18: #{tpu_custom_call.1} parent=1 // pred_check
      _
    $region19: #{tpu_custom_call.1} parent=1 // pred_check_branch
      %33 = sbr.rel (0) target = $region21
    $region20: #{tpu_custom_call.1} parent=1 // pred_region
      %34 = dma.done [#allocation3], 128
    $region21: #{tpu_custom_call.1} parent=1 // pred_fallthru
      _
    %v35 = vld [vmem:[%s0] sm:$0xf]
    %v36 = vld [vmem:[#allocation2] sm:$0xf]
    %s37 = scalar_lea.vmem [#allocation2], 4
    %v38 = vld [vmem:[%s37] sm:$0xf]
    %v39 = vld [vmem:[%s2] sm:$0xff]
    %v40 = vld [vmem:[%s2 + $0x8] sm:$0xff]
    %v41 = vld [vmem:[%s2 + $0x10] sm:$0xff]
    %v42 = vld [vmem:[%s2 + $0x18] sm:$0xff]
    %v43 = vld [vmem:[%s2 + $0x20] sm:$0xff]
    %v44 = vld [vmem:[%s2 + $0x28] sm:$0xff]
    %v45 = vld [vmem:[%s2 + $0x30] sm:$0x7]
    %vm46 = vcmask 261120
    %v48 = vsel %vm46, %v36, 0
    %50 = vmatprep.subr.mxu0 0.0
    %51 = vmatpush1.msra.mxu0 0.0
    %52 = vmatprep.subr.mxu0 0.0
    %53 = vmatpush1.msra.mxu0 0.0
    %54 = vmatprep.subr.mxu0 0.0
    %55 = vmatpush1.msra.mxu0 0.0
    %56 = vmatprep.subr.mxu0 0.0
    %57 = vmatpush1.msra.mxu0 0.0
    %58 = vmatprep.subr.mxu0 0.0
    %59 = vmatpush1.msra.mxu0 0.0
    %60 = vmatprep.subr.mxu0 0.0
    %61 = vmatpush1.msra.mxu0 0.0
    %62 = vmatprep.subr.mxu0 0.0
    %63 = vmatpush1.msra.mxu0 0.0
    %64 = vmatprep.subr.mxu0 0.0
    %65 = vmatpush1.msra.mxu0 0.0
    %66 = vmatprep.subr.mxu0 0.0
    %67 = vmatpush1.msra.mxu0 0.0
    %68 = vmatprep.subr.mxu0 0.0
    %69 = vmatpush1.msra.mxu0 0.0
    %70 = vmatprep.subr.mxu0 0.0
    %71 = vmatpush1.msra.mxu0 0.0
    %72 = vmatprep.subr.mxu0 0.0
    %73 = vmatpush1.msra.mxu0 0.0
    %74 = vmatprep.subr.mxu0 0.0
    %75 = vmatpush1.msra.mxu0 %v44
    %76 = vmatprep.subr.mxu0 0.0
    %77 = vmatpush1.msra.mxu0 %v43
    %78 = vmatprep.subr.mxu0 0.0
    %79 = vmatpush1.msra.mxu0 %v42
    %80 = vmatprep.subr.mxu0 0.0
    %81 = vmatpush1.msra.mxu0 %v41
    %82 = vmatprep.subr.mxu0 0.0
    %83 = vmatpush2.msra.mxu0 0.0
    %84 = vmatprep.subr.mxu0 0.0
    %85 = vmatpush2.msra.mxu0 0.0
    %86 = vmatprep.subr.mxu0 0.0
    %87 = vmatpush2.msra.mxu0 0.0
    %88 = vmatprep.subr.mxu0 0.0
    %89 = vmatpush2.msra.mxu0 0.0
    %90 = vmatprep.subr.mxu0 0.0
    %91 = vmatpush2.msra.mxu0 0.0
    %92 = vmatprep.subr.mxu0 0.0
    %93 = vmatpush2.msra.mxu0 0.0
    %94 = vmatprep.subr.mxu0 0.0
    %95 = vmatpush2.msra.mxu0 0.0
    %96 = vmatprep.subr.mxu0 0.0
    %97 = vmatpush2.msra.mxu0 0.0
    %98 = vmatprep.subr.mxu0 0.0
    %99 = vmatpush2.msra.mxu0 0.0
    %100 = vmatprep.subr.mxu0 0.0
    %101 = vmatpush2.msra.mxu0 0.0
    %102 = vmatprep.subr.mxu0 0.0
    %103 = vmatpush2.msra.mxu0 0.0
    %104 = vmatprep.subr.mxu0 0.0
    %105 = vmatpush2.msra.mxu0 0.0
    %106 = vmatprep.subr.mxu0 0.0
    %107 = vmatpush2.msra.mxu0 0.0
    %108 = vmatprep.subr.mxu0 0.0
    %109 = vmatpush2.msra.mxu0 0.0
    %110 = vmatprep.subr.mxu0 0.0
    %111 = vmatpush2.msra.mxu0 0.0
    %112 = vmatprep.subr.mxu0 0.0
    %113 = vmatpush2.msra.mxu0 0.0
    %114 = vmatprep.mubr.f32.mxu0 0.0
    %115 = vmatmul.mubr.f32.gmra.mxu0 %v48
    %v116 = vpop.f32.mrf.mxu0
    %v117 = vadd.f32 0.0, %v116
    %v118 = vpop.f32.mrf.mxu0
    %119 = vdwg.mxu0
    %vm120 = vcmask 130048
    %v122 = vsel %vm120, %v35, 0
    %124 = vmatprep.subr.mxu0 0.0
    %125 = vmatpush1.msra.mxu0 0.0
    %126 = vmatprep.subr.mxu0 0.0
    %127 = vmatpush1.msra.mxu0 0.0
    %128 = vmatprep.subr.mxu0 0.0
    %129 = vmatpush1.msra.mxu0 0.0
    %130 = vmatprep.subr.mxu0 0.0
    %131 = vmatpush1.msra.mxu0 0.0
    %132 = vmatprep.subr.mxu0 0.0
    %133 = vmatpush1.msra.mxu0 0.0
    %134 = vmatprep.subr.mxu0 0.0
    %135 = vmatpush1.msra.mxu0 0.0
    %136 = vmatprep.subr.mxu0 0.0
    %137 = vmatpush1.msra.mxu0 0.0
    %138 = vmatprep.subr.mxu0 0.0
    %139 = vmatpush1.msra.mxu0 0.0
    %140 = vmatprep.subr.mxu0 0.0
    %141 = vmatpush1.msra.mxu0 0.0
    %142 = vmatprep.subr.mxu0 0.0
    %143 = vmatpush1.msra.mxu0 0.0
    %144 = vmatprep.subr.mxu0 0.0
    %145 = vmatpush1.msra.mxu0 0.0
    %146 = vmatprep.subr.mxu0 0.0
    %147 = vmatpush1.msra.mxu0 0.0
    %148 = vmatprep.subr.mxu0 0.0
    %149 = vmatpush1.msra.mxu0 0.0
    %150 = vmatprep.subr.mxu0 0.0
    %151 = vmatpush1.msra.mxu0 0.0
    %152 = vmatprep.subr.mxu0 0.0
    %153 = vmatpush1.msra.mxu0 %v40
    %154 = vmatprep.subr.mxu0 0.0
    %155 = vmatpush1.msra.mxu0 %v39
    %156 = vmatprep.subr.mxu0 0.0
    %157 = vmatpush2.msra.mxu0 0.0
    %158 = vmatprep.subr.mxu0 0.0
    %159 = vmatpush2.msra.mxu0 0.0
    %160 = vmatprep.subr.mxu0 0.0
    %161 = vmatpush2.msra.mxu0 0.0
    %162 = vmatprep.subr.mxu0 0.0
    %163 = vmatpush2.msra.mxu0 0.0
    %164 = vmatprep.subr.mxu0 0.0
    %165 = vmatpush2.msra.mxu0 0.0
    %166 = vmatprep.subr.mxu0 0.0
    %167 = vmatpush2.msra.mxu0 0.0
    %168 = vmatprep.subr.mxu0 0.0
    %169 = vmatpush2.msra.mxu0 0.0
    %170 = vmatprep.subr.mxu0 0.0
    %171 = vmatpush2.msra.mxu0 0.0
    %172 = vmatprep.subr.mxu0 0.0
    %173 = vmatpush2.msra.mxu0 0.0
    %174 = vmatprep.subr.mxu0 0.0
    %175 = vmatpush2.msra.mxu0 0.0
    %176 = vmatprep.subr.mxu0 0.0
    %177 = vmatpush2.msra.mxu0 0.0
    %178 = vmatprep.subr.mxu0 0.0
    %179 = vmatpush2.msra.mxu0 0.0
    %180 = vmatprep.subr.mxu0 0.0
    %181 = vmatpush2.msra.mxu0 0.0
    %182 = vmatprep.subr.mxu0 0.0
    %183 = vmatpush2.msra.mxu0 0.0
    %184 = vmatprep.subr.mxu0 0.0
    %185 = vmatpush2.msra.mxu0 0.0
    %186 = vmatprep.subr.mxu0 0.0
    %187 = vmatpush2.msra.mxu0 0.0
    %188 = vmatprep.mubr.f32.mxu0 0.0
    %189 = vmatmul.mubr.f32.gmra.mxu0 %v122
    %v190 = vpop.f32.mrf.mxu0
    %v191 = vadd.f32 %v117, %v190
    %v192 = vpop.f32.mrf.mxu0
    %193 = vdwg.mxu0
    %v194 = vlaneseq
    %v195 = vshrl.u32 %v194, 7
    %v196 = vsub.s32 0, %v195
    %v197 = vrot.slane %v45, %v196
    %v198 = vadd.f32 %v191, %v197
    %v199 = vtanh.pop %v198
    %v200 = vlaneseq
    %v201 = vshrl.u32 %v200, 7
    %v202 = vsub.s32 1, %v201
    %v203 = vrot.slane %v45, %v202
    %v204 = vmul.f32 %v199, %v203
    %v205 = vlaneseq
    %v206 = vshrl.u32 %v205, 7
    %v207 = vsub.s32 2, %v206
    %v208 = vrot.slane %v45, %v207
    %v209 = vadd.f32 %v204, %v208
    %211 = vrot.lane.b32.xlu0 %v38, 32
    %v212 = vpop.permute.xlu0 %211
    %v214 = vmul.f32 %v209, %v212
    %216 = vrot.lane.b32.xlu0 %v209, 64
    %v217 = vpop.permute.xlu0 %216
    %v219 = vmul.f32 %v209, %v217
    %221 = vrot.lane.b32.xlu0 %v219, 32
    %v222 = vpop.permute.xlu0 %221
    %v224 = vadd.f32 %v214, %v222
    %v225 = vtanh.pop %v224
    %227 = vrot.lane.b32.xlu0 %v225, 64
    %v228 = vpop.permute.xlu0 %227
    %v230 = vmul.f32 %v209, %v228
    %v231 = vld [vmem:[%s3] sm:$0xff]
    %v232 = vld [vmem:[%s3 + $0x8] sm:$0xff]
    %v233 = vld [vmem:[%s3 + $0x10] sm:$0xff]
    %v234 = vld [vmem:[%s3 + $0x18] sm:$0xff]
    %v235 = vld [vmem:[%s3 + $0x20] sm:$0x1]
    %v236 = vlaneseq
    %v237 = vshrl.u32 %v236, 7
    %v238 = vsub.s32 0, %v237
    %v239 = vrot.slane %v235, %v238
    %241 = vrot.lane.b32.xlu0 %v230, 32
    %v242 = vpop.permute.xlu0 %241
    %v243 = vsel %vm46, %v242, 0
    %245 = vmatprep.subr.mxu0 0.0
    %246 = vmatpush1.msra.mxu0 0.0
    %247 = vmatprep.subr.mxu0 0.0
    %248 = vmatpush1.msra.mxu0 0.0
    %249 = vmatprep.subr.mxu0 0.0
    %250 = vmatpush1.msra.mxu0 0.0
    %251 = vmatprep.subr.mxu0 0.0
    %252 = vmatpush1.msra.mxu0 0.0
    %253 = vmatprep.subr.mxu0 0.0
    %254 = vmatpush1.msra.mxu0 0.0
    %255 = vmatprep.subr.mxu0 0.0
    %256 = vmatpush1.msra.mxu0 0.0
    %257 = vmatprep.subr.mxu0 0.0
    %258 = vmatpush1.msra.mxu0 0.0
    %259 = vmatprep.subr.mxu0 0.0
    %260 = vmatpush1.msra.mxu0 0.0
    %261 = vmatprep.subr.mxu0 0.0
    %262 = vmatpush1.msra.mxu0 0.0
    %263 = vmatprep.subr.mxu0 0.0
    %264 = vmatpush1.msra.mxu0 0.0
    %265 = vmatprep.subr.mxu0 0.0
    %266 = vmatpush1.msra.mxu0 0.0
    %267 = vmatprep.subr.mxu0 0.0
    %268 = vmatpush1.msra.mxu0 0.0
    %269 = vmatprep.subr.mxu0 0.0
    %270 = vmatpush1.msra.mxu0 %v234
    %271 = vmatprep.subr.mxu0 0.0
    %272 = vmatpush1.msra.mxu0 %v233
    %273 = vmatprep.subr.mxu0 0.0
    %274 = vmatpush1.msra.mxu0 %v232
    %275 = vmatprep.subr.mxu0 0.0
    %276 = vmatpush1.msra.mxu0 %v231
    %277 = vmatprep.subr.mxu0 0.0
    %278 = vmatpush2.msra.mxu0 0.0
    %279 = vmatprep.subr.mxu0 0.0
    %280 = vmatpush2.msra.mxu0 0.0
    %281 = vmatprep.subr.mxu0 0.0
    %282 = vmatpush2.msra.mxu0 0.0
    %283 = vmatprep.subr.mxu0 0.0
    %284 = vmatpush2.msra.mxu0 0.0
    %285 = vmatprep.subr.mxu0 0.0
    %286 = vmatpush2.msra.mxu0 0.0
    %287 = vmatprep.subr.mxu0 0.0
    %288 = vmatpush2.msra.mxu0 0.0
    %289 = vmatprep.subr.mxu0 0.0
    %290 = vmatpush2.msra.mxu0 0.0
    %291 = vmatprep.subr.mxu0 0.0
    %292 = vmatpush2.msra.mxu0 0.0
    %293 = vmatprep.subr.mxu0 0.0
    %294 = vmatpush2.msra.mxu0 0.0
    %295 = vmatprep.subr.mxu0 0.0
    %296 = vmatpush2.msra.mxu0 0.0
    %297 = vmatprep.subr.mxu0 0.0
    %298 = vmatpush2.msra.mxu0 0.0
    %299 = vmatprep.subr.mxu0 0.0
    %300 = vmatpush2.msra.mxu0 0.0
    %301 = vmatprep.subr.mxu0 0.0
    %302 = vmatpush2.msra.mxu0 0.0
    %303 = vmatprep.subr.mxu0 0.0
    %304 = vmatpush2.msra.mxu0 0.0
    %305 = vmatprep.subr.mxu0 0.0
    %306 = vmatpush2.msra.mxu0 0.0
    %307 = vmatprep.subr.mxu0 0.0
    %308 = vmatpush2.msra.mxu0 0.0
    %309 = vmatprep.mubr.f32.mxu0 0.0
    %310 = vmatmul.mubr.f32.gmra.mxu0 %v243
    %v311 = vpop.f32.mrf.mxu0
    %v312 = vadd.f32 %v239, %v311
    %v313 = vpop.f32.mrf.mxu0
    %314 = vdwg.mxu0
    %vm315 = vcmask 125952
    %316 = vst.msk [vmem:[#allocation5] sm:$0xf] %vm315, %v312
    %vm318 = vcmask 257024
    %319 = vst.msk [vmem:[#allocation6] sm:$0xf] %vm318, %v242
    %321 = vrot.lane.b32.xlu0 %v224, 96
    %v322 = vpop.permute.xlu0 %321
    %s324 = scalar_lea.vmem [#allocation6], 4
    %325 = vst.msk [vmem:[%s324] sm:$0xf] %vm318, %v322
    // Predicated region
    $region22: #{tpu_custom_call.1} parent=1 // pred_check
      _
    $region23: #{tpu_custom_call.1} parent=1 // pred_check_branch
      %327 = sbr.rel (0) target = $region25
    $region24: #{tpu_custom_call.1} parent=1 // pred_region
      %s329 = ssub.s32 64, 64
      %330 = vsyncadd [#allocation4], %s329
      %s332 = sshll.u32 [#allocation5], 4
      %s333 = int_to_ptr.vmem [resolvable:$true] %s332
      %335 = dma.vmem_to_hbm [thread:$0]  %s333, 64, %s4, [#allocation4]
    $region25: #{tpu_custom_call.1} parent=1 // pred_fallthru
      _
    // Predicated region
    $region26: #{tpu_custom_call.1} parent=1 // pred_check
      _
    $region27: #{tpu_custom_call.1} parent=1 // pred_check_branch
      %337 = sbr.rel (0) target = $region29
    $region28: #{tpu_custom_call.1} parent=1 // pred_region
      %s339 = ssub.s32 128, 128
      %340 = vsyncadd [#allocation7], %s339
      %s341 = sshll.u32 [#allocation6], 4
      %s342 = int_to_ptr.vmem [resolvable:$true] %s341
      %347 = dma.vmem_to_hbm [thread:$0]  %s342, 128, %s5, [#allocation7], 64, 64, 4
    $region29: #{tpu_custom_call.1} parent=1 // pred_fallthru
      _
    // Predicated region
    $region30: #{tpu_custom_call.1} parent=1 // pred_check
      _
    $region31: #{tpu_custom_call.1} parent=1 // pred_check_branch
      %349 = sbr.rel (0) target = $region33
    $region32: #{tpu_custom_call.1} parent=1 // pred_region
      %350 = dma.done [#allocation4], 64
    $region33: #{tpu_custom_call.1} parent=1 // pred_fallthru
      _
    // Predicated region
    $region34: #{tpu_custom_call.1} parent=1 // pred_check
      _
    $region35: #{tpu_custom_call.1} parent=1 // pred_check_branch
      %352 = sbr.rel (0) target = $region37
    $region36: #{tpu_custom_call.1} parent=1 // pred_region
      %353 = dma.done [#allocation7], 128
    $region37: #{tpu_custom_call.1} parent=1 // pred_fallthru
      _
    %354 = vsyncpa [#allocation3], 1
    %355 = vsyncpa [#allocation4], 1
    %356 = vsyncpa [#allocation7], 1

</llo_original>
